<compile_context>
chip_gen: v6e
topology: v6e:2x2x1
jax: 0.10.0
libtpu: 0.0.40
codegen_flags: <defaults>
</compile_context>

<pallas_src>
import jax
import jax.numpy as jnp
from jax import lax
from jax.experimental import pallas as pl
from jax.experimental.pallas import tpu as pltpu


def _make_kernel(bB, bT, B, T, strip_w):
    """Build the kernel closure for a given (static) tiling."""
    n_strips = bT // strip_w
    need_row_mask = (B % bB) != 0               # last B-tile sticks out past B
    need_col_mask = (T % bT) != 0               # last T-tile sticks out past T

    def kernel(seq_ref, logp_ref, out_ref, num_acc, den_acc):
        i = pl.program_id(0)                    # batch tile ("parallel")
        k = pl.program_id(1)                    # T tile (reduction, last axis)

        @pl.when(k == 0)
        def _init():
            num_acc[...] = jnp.zeros_like(num_acc)
            den_acc[...] = jnp.zeros_like(den_acc)

        if need_row_mask:
            row = i * bB + lax.broadcasted_iota(jnp.int32, (bB, strip_w), 0)
            row_ok = row < B

        # Walk the (bB, bT) tile in static 128-lane strips; keep the running
        # partials in vregs and touch the (bB, strip_w) VMEM accumulators
        # exactly once per grid step.
        num_part = jnp.zeros((bB, strip_w), jnp.float32)
        den_part = jnp.zeros((bB, strip_w), jnp.float32)
        for j in range(n_strips):
            sl = pl.ds(j * strip_w, strip_w)    # static, lane-aligned slice
            tok = seq_ref[:, sl]                # native (possibly narrow) dtype
            logp = logp_ref[:, sl].astype(jnp.float32)
            mask = tok > 0
            if need_col_mask:
                col = (k * bT + j * strip_w
                       + lax.broadcasted_iota(jnp.int32, (bB, strip_w), 1))
                mask = mask & (col < T)
            if need_row_mask:
                mask = mask & row_ok
            num_part = num_part + jnp.where(mask, logp, 0.0)
            den_part = den_part + jnp.where(mask, 1.0, 0.0)
        num_acc[...] += num_part
        den_acc[...] += den_part

        @pl.when(k == pl.num_programs(1) - 1)
        def _finalize():
            # Single cross-lane reduce per B-tile; tiny (bB, 2) writeback.
            out_ref[:, 0:1] = jnp.sum(num_acc[...], axis=1, keepdims=True)
            out_ref[:, 1:2] = jnp.sum(den_acc[...], axis=1, keepdims=True)

    return kernel


def _pick_bB(B):
    # Keep bB <= 64 (strip partials stay register-resident) and, whenever B
    # allows it, produce >= 2 batch tiles so the "parallel" axis shards
    # across both v7x TensorCores.  Multiple of 8 unless B itself is tiny.
    if B <= 8:
        return B                                 # full-extent block (legal)
    for c in (64, 32, 16, 8):
        if pl.cdiv(B, c) >= 2:
            return c
    return B


def _pick_bT(T):
    # Lane-dense tiles, big enough to amortize the ~0.35us per-step overhead
    # (matters most on v5e), small enough that 2 inputs x 2 buffers stays a
    # few MiB (v7x: 64 MiB physical / 32 MiB scoped VMEM).
    if T < 128:
        return T                                 # full-extent block (legal)
    for c in (4096, 2048, 1024, 512, 256, 128):
        if c <= T:
            return c
    return T


def reward_criterion(seq, logP, rewards):
    """Pallas implementation of RewardCriterion.forward.

    seq:     (B, T) integer tokens (mask = seq > 0); any int dtype.
    logP:    (B, T) float log-probabilities (f32 or bf16).
    rewards: (B,)   per-sequence rewards.
    returns: scalar float32 loss (NaN for an empty mask, matching PyTorch's
             mean over an empty masked_select).
    """
    B, T = logP.shape
    assert seq.shape == (B, T) and rewards.shape[0] == B

    bB = _pick_bB(B)
    bT = _pick_bT(T)
    nB = pl.cdiv(B, bB)
    nT = pl.cdiv(T, bT)
    strip_w = 128 if bT % 128 == 0 else bT      # bT < 128 only when bT == T

    partials = pl.pallas_call(
        _make_kernel(bB, bT, B, T, strip_w),
        out_shape=jax.ShapeDtypeStruct((B, 2), jnp.float32),
        grid_spec=pltpu.PrefetchScalarGridSpec(
            num_scalar_prefetch=0,
            grid=(nB, nT),                       # reduction (T) axis last
            in_specs=[
                pl.BlockSpec((bB, bT), lambda i, k: (i, k)),   # seq
                pl.BlockSpec((bB, bT), lambda i, k: (i, k)),   # logP
            ],
            out_specs=pl.BlockSpec((bB, 2), lambda i, k: (i, 0)),
            scratch_shapes=[
                pltpu.VMEM((bB, strip_w), jnp.float32),        # num accumulator
                pltpu.VMEM((bB, strip_w), jnp.float32),        # den accumulator
            ],
        ),
        compiler_params=pltpu.CompilerParams(
            dimension_semantics=("parallel", "arbitrary")),
    )(seq, logP)

    row_num = partials[:, 0]                    # sum of masked logP per row
    row_den = partials[:, 1]                    # masked-token count per row
    num = jnp.sum(rewards.astype(jnp.float32) * row_num)
    den = jnp.sum(row_den)
    # mean over selected elements; negate once here (matches PyTorch).
    return -(num / den)


def _reference(seq, logP, rewards):
    mask = (seq > 0).astype(jnp.float32)
    rew = rewards.reshape(-1, 1).astype(jnp.float32)
    num = jnp.sum(-logP.astype(jnp.float32) * rew * mask)
    den = jnp.sum(mask)
    return num / den


if __name__ == "__main__":
    # --- small case (single block, full-extent tiles) -------------------------
    k1, k2, k3 = jax.random.split(jax.random.PRNGKey(0), 3)
    B, T = 2, 8
    seq = jax.random.randint(k1, (B, T), minval=0, maxval=10, dtype=jnp.int32)
    logP = -jax.random.uniform(k2, (B, T), dtype=jnp.float32, minval=0.1, maxval=5.0)
    rewards = jax.random.normal(k3, (B,), dtype=jnp.float32)
    loss = reward_criterion(seq, logP, rewards)
    jax.block_until_ready(loss)
    ref = _reference(seq, logP, rewards)
    assert jnp.allclose(loss, ref, rtol=1e-6, atol=1e-6), (loss, ref)

    # --- tiled case (>=2 B-tiles on the parallel axis, strip loop) ------------
    k4, k5, k6 = jax.random.split(jax.random.PRNGKey(1), 3)
    B2, T2 = 64, 2048
    seq2 = jax.random.randint(k4, (B2, T2), minval=0, maxval=5, dtype=jnp.int32)
    logP2 = -jax.random.uniform(k5, (B2, T2), dtype=jnp.float32, minval=0.1, maxval=5.0)
    rewards2 = jax.random.normal(k6, (B2,), dtype=jnp.float32)
    loss2 = reward_criterion(seq2, logP2, rewards2)
    jax.block_until_ready(loss2)
    ref2 = _reference(seq2, logP2, rewards2)
    assert jnp.allclose(loss2, ref2, rtol=1e-5, atol=1e-5), (loss2, ref2)

    # --- ragged case (B and T not tile-aligned -> iota-masked edge tiles) -----
    k7, k8, k9 = jax.random.split(jax.random.PRNGKey(2), 3)
    B3, T3 = 12, 300
    seq3 = jax.random.randint(k7, (B3, T3), minval=0, maxval=3, dtype=jnp.int32)
    logP3 = -jax.random.uniform(k8, (B3, T3), dtype=jnp.float32, minval=0.1, maxval=5.0)
    rewards3 = jax.random.normal(k9, (B3,), dtype=jnp.float32)
    loss3 = reward_criterion(seq3, logP3, rewards3)
    jax.block_until_ready(loss3)
    ref3 = _reference(seq3, logP3, rewards3)
    assert jnp.allclose(loss3, ref3, rtol=1e-5, atol=1e-5), (loss3, ref3)

    print("KERNEL_OK")
</pallas_src>

<mosaic_0001>
module attributes {stable_mosaic.version = 11 : i64} {
  func.func @kernel(%arg0: i32, %arg1: i32, %arg2: memref<2x8xi32, #tpu.memory_space<vmem>>, %arg3: memref<2x8xf32, #tpu.memory_space<vmem>>, %arg4: memref<2x2xf32, #tpu.memory_space<vmem>>, %arg5: memref<2x8xf32, #tpu.memory_space<vmem>>, %arg6: memref<2x8xf32, #tpu.memory_space<vmem>>) attributes {dimension_semantics = [#tpu.dimension_semantics<parallel>, #tpu.dimension_semantics<arbitrary>], iteration_bounds = array<i64: 1, 1>, scalar_prefetch = 0 : i64, scratch_operands = 2 : i64, tpu.core_type = #tpu.core_type<tc>, window_params = [{transform_indices = @transform_0, window_bounds = array<i64: 2, 8>}, {transform_indices = @transform_1, window_bounds = array<i64: 2, 8>}, {transform_indices = @transform_2, window_bounds = array<i64: 2, 2>}]} {
    %c0_i32 = arith.constant 0 : i32
    %0 = arith.cmpi eq, %arg1, %c0_i32 : i32
    %1 = arith.extui %0 : i1 to i32
    %c0_i32_0 = arith.constant 0 : i32
    %2 = arith.cmpi ne, %1, %c0_i32_0 : i32
    scf.if %2 {
      %cst_19 = arith.constant 0.000000e+00 : f32
      %25 = vector.broadcast %cst_19 : f32 to vector<2x8xf32>
      %c0_20 = arith.constant 0 : index
      %c0_21 = arith.constant 0 : index
      %26 = vector.load %arg5[%c0_20, %c0_21] : memref<2x8xf32, #tpu.memory_space<vmem>>, vector<2x8xf32>
      tpu.vector_store %arg5[%c0_20, %c0_21], %25 {strides = array<i32>} : memref<2x8xf32, #tpu.memory_space<vmem>>, vector<2x8xf32>,
      %cst_22 = arith.constant 0.000000e+00 : f32
      %27 = vector.broadcast %cst_22 : f32 to vector<2x8xf32>
      %c0_23 = arith.constant 0 : index
      %c0_24 = arith.constant 0 : index
      %28 = vector.load %arg6[%c0_23, %c0_24] : memref<2x8xf32, #tpu.memory_space<vmem>>, vector<2x8xf32>
      tpu.vector_store %arg6[%c0_23, %c0_24], %27 {strides = array<i32>} : memref<2x8xf32, #tpu.memory_space<vmem>>, vector<2x8xf32>,
    } else {
    }
    %cst = arith.constant 0.000000e+00 : f32
    %3 = vector.broadcast %cst : f32 to vector<2x8xf32>
    %cst_1 = arith.constant 0.000000e+00 : f32
    %4 = vector.broadcast %cst_1 : f32 to vector<2x8xf32>
    %c0 = arith.constant 0 : index
    %c0_2 = arith.constant 0 : index
    %5 = vector.load %arg2[%c0, %c0_2] : memref<2x8xi32, #tpu.memory_space<vmem>>, vector<2x8xi32>
    %c0_3 = arith.constant 0 : index
    %c0_4 = arith.constant 0 : index
    %6 = vector.load %arg3[%c0_3, %c0_4] : memref<2x8xf32, #tpu.memory_space<vmem>>, vector<2x8xf32>
    %c0_i32_5 = arith.constant 0 : i32
    %7 = vector.broadcast %c0_i32_5 : i32 to vector<2x8xi32>
    %8 = arith.cmpi sgt, %5, %7 : vector<2x8xi32>
    %cst_6 = arith.constant 0.000000e+00 : f32
    %9 = vector.broadcast %cst_6 : f32 to vector<2x8xf32>
    %10 = arith.select %8, %6, %9 : vector<2x8xi1>, vector<2x8xf32>
    %11 = arith.addf %3, %10 : vector<2x8xf32>
    %cst_7 = arith.constant 1.000000e+00 : f32
    %cst_8 = arith.constant 0.000000e+00 : f32
    %12 = vector.broadcast %cst_7 : f32 to vector<2x8xf32>
    %13 = vector.broadcast %cst_8 : f32 to vector<2x8xf32>
    %14 = arith.select %8, %12, %13 : vector<2x8xi1>, vector<2x8xf32>
    %15 = arith.addf %4, %14 : vector<2x8xf32>
    %c0_9 = arith.constant 0 : index
    %c0_10 = arith.constant 0 : index
    %16 = vector.load %arg5[%c0_9, %c0_10] : memref<2x8xf32, #tpu.memory_space<vmem>>, vector<2x8xf32>
    %17 = arith.addf %16, %11 : vector<2x8xf32>
    %c0_11 = arith.constant 0 : index
    %c0_12 = arith.constant 0 : index
    %18 = vector.load %arg5[%c0_11, %c0_12] : memref<2x8xf32, #tpu.memory_space<vmem>>, vector<2x8xf32>
    tpu.vector_store %arg5[%c0_11, %c0_12], %17 {strides = array<i32>} : memref<2x8xf32, #tpu.memory_space<vmem>>, vector<2x8xf32>,
    %c0_13 = arith.constant 0 : index
    %c0_14 = arith.constant 0 : index
    %19 = vector.load %arg6[%c0_13, %c0_14] : memref<2x8xf32, #tpu.memory_space<vmem>>, vector<2x8xf32>
    %20 = arith.addf %19, %15 : vector<2x8xf32>
    %c0_15 = arith.constant 0 : index
    %c0_16 = arith.constant 0 : index
    %21 = vector.load %arg6[%c0_15, %c0_16] : memref<2x8xf32, #tpu.memory_space<vmem>>, vector<2x8xf32>
    tpu.vector_store %arg6[%c0_15, %c0_16], %20 {strides = array<i32>} : memref<2x8xf32, #tpu.memory_space<vmem>>, vector<2x8xf32>,
    %c0_i32_17 = arith.constant 0 : i32
    %22 = arith.cmpi eq, %arg1, %c0_i32_17 : i32
    %23 = arith.extui %22 : i1 to i32
    %c0_i32_18 = arith.constant 0 : i32
    %24 = arith.cmpi ne, %23, %c0_i32_18 : i32
    scf.if %24 {
      %c0_19 = arith.constant 0 : index
      %c0_20 = arith.constant 0 : index
      %25 = vector.load %arg5[%c0_19, %c0_20] : memref<2x8xf32, #tpu.memory_space<vmem>>, vector<2x8xf32>
      %cst_21 = arith.constant dense<0.000000e+00> : vector<2xf32>
      %26 = vector.multi_reduction <add>, %25, %cst_21 [1] : vector<2x8xf32> to vector<2xf32>
      %27 = vector.shape_cast %26 : vector<2xf32> to vector<2x1xf32>
      %c0_22 = arith.constant 0 : index
      %c0_23 = arith.constant 0 : index
      %28 = vector.load %arg4[%c0_22, %c0_23] : memref<2x2xf32, #tpu.memory_space<vmem>>, vector<2x1xf32>
      tpu.vector_store %arg4[%c0_22, %c0_23], %27 {strides = array<i32>} : memref<2x2xf32, #tpu.memory_space<vmem>>, vector<2x1xf32>,
      %c0_24 = arith.constant 0 : index
      %c0_25 = arith.constant 0 : index
      %29 = vector.load %arg6[%c0_24, %c0_25] : memref<2x8xf32, #tpu.memory_space<vmem>>, vector<2x8xf32>
      %cst_26 = arith.constant dense<0.000000e+00> : vector<2xf32>
      %30 = vector.multi_reduction <add>, %29, %cst_26 [1] : vector<2x8xf32> to vector<2xf32>
      %31 = vector.shape_cast %30 : vector<2xf32> to vector<2x1xf32>
      %c0_27 = arith.constant 0 : index
      %c1 = arith.constant 1 : index
      %32 = vector.load %arg4[%c0_27, %c1] : memref<2x2xf32, #tpu.memory_space<vmem>>, vector<2x1xf32>
      tpu.vector_store %arg4[%c0_27, %c1], %31 {strides = array<i32>} : memref<2x2xf32, #tpu.memory_space<vmem>>, vector<2x1xf32>,
    } else {
    }
    return
  }
  func.func @transform_0(%arg0: i32, %arg1: i32) -> (i32, i32) {
    %c0_i32 = arith.constant 0 : i32
    return %arg0, %arg1 : i32, i32
  }
  func.func @transform_1(%arg0: i32, %arg1: i32) -> (i32, i32) {
    %c0_i32 = arith.constant 0 : i32
    return %arg0, %arg1 : i32, i32
  }
  func.func @transform_2(%arg0: i32, %arg1: i32) -> (i32, i32) {
    %c0_i32 = arith.constant 0 : i32
    %c0_i32_0 = arith.constant 0 : i32
    return %arg0, %c0_i32 : i32, i32
  }
}

</mosaic_0001>

<llo_original>
// kernel: tpu_custom_call.1
$region0: #{tpu_custom_call.1}
  #allocation0 [shape = 'u32[]', space=smem, size = 0x4, offset = 0x4, fixed_abs, tag = 'smem constant byte address 0x4 - core index']
  #allocation1 [shape = 'u32[144,128]{1,0:T(1,128)}', space=vmem, size = 0x12000, scoped, tag = 'internal scratch']
  #allocation2 [shape = 'f32[2,8]{1,0:T(2,128)}', space=vmem, size = 0x400, scoped, tag = 'scratch operand']
  #allocation3 [shape = 'f32[2,8]{1,0:T(2,128)}', space=vmem, size = 0x400, scoped, tag = 'scratch operand']
  %s0 = inlined_call_operand.hbm [shape: s32[2,8], index: 0, kind: input, shape index: {}]
  %s1 = inlined_call_operand.hbm [shape: f32[2,8], index: 1, kind: input, shape index: {}]
  %s2 = inlined_call_operand.hbm [shape: f32[2,2], index: 2, kind: output, shape index: {}]
  %s3 = sld [smem:[#allocation0]]
  $region34: #{tpu_custom_call.1} parent=0
    _
  %s5 = ssub.s32 1, %s3
  %s6 = scalar_select 0, %s5, %s3
  $region1: #{tpu_custom_call.1} parent=0
    #allocation4 [shape = 'u8[1024]{0}', space=vmem, size = 0x400, scoped, tag = 'input window, operand 0, single buffered']
    #allocation5 [shape = 's32[1]{0}', space=sflag, size = 0x4, scoped, tag = 'scoped memory for tpu_custom_call.1']
    #allocation6 [shape = 's32[1]{0}', space=sflag, size = 0x4, scoped, tag = 'scoped memory for tpu_custom_call.1']
    #allocation7 [shape = 'u8[1024]{0}', space=vmem, size = 0x400, scoped, tag = 'input window, operand 1, single buffered']
    #allocation8 [shape = 's32[1]{0}', space=sflag, size = 0x4, scoped, tag = 'scoped memory for tpu_custom_call.1']
    #allocation9 [shape = 'u8[1024]{0}', space=vmem, size = 0x400, scoped, tag = 'output window, operand 0, single buffered']
    %7 = vsyncpa [#allocation5], 0
    %8 = vsyncpa [#allocation8], 0
    %9 = vsyncpa [#allocation6], 0
    // Predicated region
    $region2: #{tpu_custom_call.1} parent=1 // pred_check
      _
    $region3: #{tpu_custom_call.1} parent=1 // pred_check_branch
      %11 = sbr.rel (0) target = $region5
    $region4: #{tpu_custom_call.1} parent=1 // pred_region
      %s13 = ssub.s32 32, 32
      %14 = vsyncadd [#allocation5], %s13
      %s16 = sshll.u32 [#allocation4], 4
      %s17 = int_to_ptr.vmem [resolvable:$true] %s16
      %19 = dma.hbm_to_vmem [thread:$0]  %s0, 32, %s17, [#allocation5]
    $region5: #{tpu_custom_call.1} parent=1 // pred_fallthru
      _
    // Predicated region
    $region6: #{tpu_custom_call.1} parent=1 // pred_check
      _
    $region7: #{tpu_custom_call.1} parent=1 // pred_check_branch
      %21 = sbr.rel (0) target = $region9
    $region8: #{tpu_custom_call.1} parent=1 // pred_region
      %s23 = ssub.s32 32, 32
      %24 = vsyncadd [#allocation8], %s23
      %s26 = sshll.u32 [#allocation7], 4
      %s27 = int_to_ptr.vmem [resolvable:$true] %s26
      %29 = dma.hbm_to_vmem [thread:$0]  %s1, 32, %s27, [#allocation8]
    $region9: #{tpu_custom_call.1} parent=1 // pred_fallthru
      _
    // Predicated region
    $region10: #{tpu_custom_call.1} parent=1 // pred_check
      _
    $region11: #{tpu_custom_call.1} parent=1 // pred_check_branch
      %31 = sbr.rel (0) target = $region13
    $region12: #{tpu_custom_call.1} parent=1 // pred_region
      %32 = dma.done [#allocation5], 32
    $region13: #{tpu_custom_call.1} parent=1 // pred_fallthru
      _
    // Predicated region
    $region14: #{tpu_custom_call.1} parent=1 // pred_check
      _
    $region15: #{tpu_custom_call.1} parent=1 // pred_check_branch
      %34 = sbr.rel (0) target = $region17
    $region16: #{tpu_custom_call.1} parent=1 // pred_region
      %35 = dma.done [#allocation8], 32
    $region17: #{tpu_custom_call.1} parent=1 // pred_fallthru
      _
    %p36 = scmp.eq.s32.totalorder 0, 0
    // Predicated region
    $region18: #{tpu_custom_call.1} parent=1 // pred_check
      %p37 = pneg %p36
    $region19: #{tpu_custom_call.1} parent=1 // pred_check_branch
      %39 = sbr.rel (%p37) target = $region21
    $region20: #{tpu_custom_call.1} parent=1 // pred_region
      %vm40 = vcmask 58368
      %41 = vst.msk [vmem:[#allocation2] sm:$0x3] %vm40, 0.0
      %42 = vst.msk [vmem:[#allocation3] sm:$0x3] %vm40, 0.0
    $region21: #{tpu_custom_call.1} parent=1 // pred_fallthru
      _
    %v43 = vld [vmem:[#allocation4] sm:$0x3]
    %v44 = vld [vmem:[#allocation7] sm:$0x3]
    %vm45 = vcmp.gt.s32.totalorder %v43, 0
    %v46 = vsel %vm45, %v44, 0.0
    %v47 = vadd.f32 %v46, 0.0
    %v48 = vsel %vm45, 1.0, 0.0
    %v49 = vadd.f32 %v48, 0.0
    %v50 = vld [vmem:[#allocation2] sm:$0x3]
    %v51 = vadd.f32 %v50, %v47
    %vm52 = vcmask 58368
    %53 = vst.msk [vmem:[#allocation2] sm:$0x3] %vm52, %v51
    %v54 = vld [vmem:[#allocation3] sm:$0x3]
    %v55 = vadd.f32 %v54, %v49
    %56 = vst.msk [vmem:[#allocation3] sm:$0x3] %vm52, %v55
    // Predicated region
    $region22: #{tpu_custom_call.1} parent=1 // pred_check
      %p57 = pneg %p36
    $region23: #{tpu_custom_call.1} parent=1 // pred_check_branch
      %59 = sbr.rel (%p57) target = $region25
    $region24: #{tpu_custom_call.1} parent=1 // pred_region
      %v60 = vld [vmem:[#allocation2] sm:$0x3]
      %v61 = vsel %vm52, %v60, 0.0
      %62 = vadd.xlane.f32.xlu0 %v61
      %v63 = vpop.xlane.xlu0 %62
      %vm64 = vcmask 1024
      %65 = vst.msk [vmem:[#allocation9] sm:$0x3] %vm64, %v63
      %v66 = vld [vmem:[#allocation3] sm:$0x3]
      %v67 = vsel %vm52, %v66, 0.0
      %68 = vadd.xlane.f32.xlu0 %v67
      %v69 = vpop.xlane.xlu0 %68
      %vm70 = vcmask 9224
      %71 = vst.msk [vmem:[#allocation9] sm:$0x3] %vm70, %v69
    $region25: #{tpu_custom_call.1} parent=1 // pred_fallthru
      _
    // Predicated region
    $region26: #{tpu_custom_call.1} parent=1 // pred_check
      _
    $region27: #{tpu_custom_call.1} parent=1 // pred_check_branch
      %73 = sbr.rel (0) target = $region29
    $region28: #{tpu_custom_call.1} parent=1 // pred_region
      %s75 = ssub.s32 32, 32
      %76 = vsyncadd [#allocation6], %s75
      %s78 = sshll.u32 [#allocation9], 4
      %s79 = int_to_ptr.vmem [resolvable:$true] %s78
      %81 = dma.vmem_to_hbm [thread:$0]  %s79, 32, %s2, [#allocation6]
    $region29: #{tpu_custom_call.1} parent=1 // pred_fallthru
      _
    // Predicated region
    $region30: #{tpu_custom_call.1} parent=1 // pred_check
      _
    $region31: #{tpu_custom_call.1} parent=1 // pred_check_branch
      %83 = sbr.rel (0) target = $region33
    $region32: #{tpu_custom_call.1} parent=1 // pred_region
      %84 = dma.done [#allocation6], 32
    $region33: #{tpu_custom_call.1} parent=1 // pred_fallthru
      _
    %85 = vsyncpa [#allocation5], 1
    %86 = vsyncpa [#allocation8], 1
    %87 = vsyncpa [#allocation6], 1

</llo_original>
